<compile_context>
chip_gen: v7x
topology: tpu7x:2x2x1
jax: 0.10.0
libtpu: 0.0.40
codegen_flags: <defaults>
</compile_context>

<pallas_src>
import jax
import jax.numpy as jnp
from jax.experimental import pallas as pl
from jax.experimental.pallas import tpu as pltpu

HIDDEN = 32
LANES = 128          # TPU lane width; pad class dim / action slab to this
NEG = -1e30          # bias for padded logit columns (never sampled, exp() -> 0)
TILE_B_MAX = 512     # rows per grid step once the batch is large


def _round_up(x, m):
    return (x + m - 1) // m * m


def actor_kernel(x_ref, w1_ref, b1_ref, w2_ref, b2_ref, g_ref,
                 logits_ref, logp_ref, action_ref):
    # ---- MLP hot path: bf16 operands on the MXU, f32 accumulation ----
    x = x_ref[...].astype(jnp.bfloat16)
    w1 = w1_ref[...].astype(jnp.bfloat16)
    h = jnp.dot(x, w1, preferred_element_type=jnp.float32) + b1_ref[...]
    h = jnp.maximum(h, 0.0)
    w2 = w2_ref[...].astype(jnp.bfloat16)
    logits = jnp.dot(h.astype(jnp.bfloat16), w2,
                     preferred_element_type=jnp.float32) + b2_ref[...]
    logits_ref[...] = logits

    # ---- fused log_softmax (Categorical's normalized logits) ----
    m = jnp.max(logits, axis=-1, keepdims=True)
    shifted = logits - m
    lse = jnp.log(jnp.sum(jnp.exp(shifted), axis=-1, keepdims=True))
    logp_ref[...] = shifted - lse

    # ---- Categorical(logits).sample() via Gumbel-max ----
    z = logits + g_ref[...]
    ids = jax.lax.broadcasted_iota(jnp.int32, z.shape, 1)
    is_max = z == jnp.max(z, axis=-1, keepdims=True)
    amax = jnp.min(jnp.where(is_max, ids, jnp.int32(z.shape[-1])),
                   axis=-1, keepdims=True)                    # (TB, 1)
    # lane-dense int32 slab; wrapper reads column 0
    action_ref[...] = jnp.broadcast_to(amax, action_ref.shape)


def actor_forward(x, params, key):
    """Returns (action, logits, log_probs).  (logits, log_probs) stand in for
    the torch Categorical distribution object."""
    B, in_dim = x.shape
    out_dim = params["w2"].shape[1]
    pad_out = _round_up(out_dim, LANES)

    # batch tiling: large tiles amortize per-step pipeline overhead
    tb = min(TILE_B_MAX, _round_up(B, 8))
    pB = _round_up(B, tb)

    # pad inputs / weights so every block is (8, 128)-friendly and lane-dense
    x_p = jnp.pad(x, ((0, pB - B), (0, 0)))
    w2_p = jnp.zeros((HIDDEN, pad_out), jnp.float32).at[:, :out_dim].set(params["w2"])
    b2_p = jnp.full((1, pad_out), NEG, jnp.float32).at[:, :out_dim].set(params["b2"])

    # Gumbel noise generated host-side (pltpu.prng_* is not available in the
    # CPU interpret sandbox); semantics identical to in-kernel Gumbel-max.
    gumbel = jax.random.gumbel(key, (pB, pad_out), jnp.float32)

    grid = (pB // tb,)
    logits_p, logp_p, action_p = pl.pallas_call(
        actor_kernel,
        out_shape=(
            jax.ShapeDtypeStruct((pB, pad_out), jnp.float32),
            jax.ShapeDtypeStruct((pB, pad_out), jnp.float32),
            jax.ShapeDtypeStruct((pB, LANES), jnp.int32),
        ),
        grid=grid,
        in_specs=[
            pl.BlockSpec((tb, in_dim), lambda i: (i, 0)),       # state tile
            pl.BlockSpec((in_dim, HIDDEN), lambda i: (0, 0)),   # W1 (resident)
            pl.BlockSpec((1, HIDDEN), lambda i: (0, 0)),        # b1 (resident)
            pl.BlockSpec((HIDDEN, pad_out), lambda i: (0, 0)),  # W2 (resident)
            pl.BlockSpec((1, pad_out), lambda i: (0, 0)),       # b2 (resident)
            pl.BlockSpec((tb, pad_out), lambda i: (i, 0)),      # gumbel tile
        ],
        out_specs=(
            pl.BlockSpec((tb, pad_out), lambda i: (i, 0)),      # logits
            pl.BlockSpec((tb, pad_out), lambda i: (i, 0)),      # log_probs
            pl.BlockSpec((tb, LANES), lambda i: (i, 0)),        # action slab
        ),
        compiler_params=pltpu.CompilerParams(
            dimension_semantics=("parallel",)),                 # v7x: 2 TCs
    )(x_p, params["w1"], params["b1"], b2_p if False else w2_p, b2_p, gumbel)

    action = action_p[:B, 0]                 # (B,) like dist.sample()
    logits = logits_p[:B, :out_dim]
    log_probs = logp_p[:B, :out_dim]
    return action, logits, log_probs


def init_actor_params(key, in_dim, out_dim):
    """Deterministic init matching torch.nn.Linear defaults:
    U(-1/sqrt(fan_in), 1/sqrt(fan_in)) for both weight and bias."""
    k1, k2, k3, k4 = jax.random.split(key, 4)
    lim1 = 1.0 / jnp.sqrt(in_dim)
    lim2 = 1.0 / jnp.sqrt(HIDDEN)
    return {
        "w1": jax.random.uniform(k1, (in_dim, HIDDEN), jnp.float32, -lim1, lim1),
        "b1": jax.random.uniform(k2, (1, HIDDEN), jnp.float32, -lim1, lim1),
        "w2": jax.random.uniform(k3, (HIDDEN, out_dim), jnp.float32, -lim2, lim2),
        "b2": jax.random.uniform(k4, (1, out_dim), jnp.float32, -lim2, lim2),
    }


if __name__ == "__main__":
    key = jax.random.PRNGKey(0)
    kp, kx, ks = jax.random.split(key, 3)

    B, IN_DIM, OUT_DIM = 8, 16, 4
    params = init_actor_params(kp, IN_DIM, OUT_DIM)
    state = jax.random.normal(kx, (B, IN_DIM), jnp.float32)

    action, logits, log_probs = actor_forward(state, params, ks)
    jax.block_until_ready((action, logits, log_probs))

    # shape / range checks
    assert action.shape == (B,) and action.dtype == jnp.int32
    assert logits.shape == (B, OUT_DIM) and log_probs.shape == (B, OUT_DIM)
    assert bool(jnp.all((action >= 0) & (action < OUT_DIM)))
    assert bool(jnp.all(jnp.isfinite(logits)))

    # numerical check vs. pure-JAX reference (loose tolerance for bf16 MXU path)
    h_ref = jnp.maximum(state @ params["w1"] + params["b1"], 0.0)
    logits_ref = h_ref @ params["w2"] + params["b2"]
    assert bool(jnp.allclose(logits, logits_ref, rtol=2e-2, atol=5e-2))
    assert bool(jnp.allclose(jnp.sum(jnp.exp(log_probs), -1), 1.0, atol=1e-3))

    print("KERNEL_OK")
</pallas_src>

<mosaic_0001>
module attributes {stable_mosaic.version = 11 : i64} {
  func.func @actor_kernel(%arg0: i32, %arg1: memref<8x16xf32, #tpu.memory_space<vmem>>, %arg2: memref<16x32xf32, #tpu.memory_space<vmem>>, %arg3: memref<1x32xf32, #tpu.memory_space<vmem>>, %arg4: memref<32x128xf32, #tpu.memory_space<vmem>>, %arg5: memref<1x128xf32, #tpu.memory_space<vmem>>, %arg6: memref<8x128xf32, #tpu.memory_space<vmem>>, %arg7: memref<8x128xf32, #tpu.memory_space<vmem>>, %arg8: memref<8x128xf32, #tpu.memory_space<vmem>>, %arg9: memref<8x128xi32, #tpu.memory_space<vmem>>) attributes {dimension_semantics = [#tpu.dimension_semantics<parallel>], iteration_bounds = array<i64: 1>, scalar_prefetch = 0 : i64, scratch_operands = 0 : i64, tpu.core_type = #tpu.core_type<tc>, window_params = [{transform_indices = @transform_0, window_bounds = array<i64: 8, 16>}, {pipeline_mode = #tpu.pipeline_mode<synchronous>, transform_indices = @transform_1, window_bounds = array<i64: 16, 32>}, {pipeline_mode = #tpu.pipeline_mode<synchronous>, transform_indices = @transform_2, window_bounds = array<i64: 1, 32>}, {pipeline_mode = #tpu.pipeline_mode<synchronous>, transform_indices = @transform_3, window_bounds = array<i64: 32, 128>}, {pipeline_mode = #tpu.pipeline_mode<synchronous>, transform_indices = @transform_4, window_bounds = array<i64: 1, 128>}, {transform_indices = @transform_5, window_bounds = array<i64: 8, 128>}, {transform_indices = @transform_6, window_bounds = array<i64: 8, 128>}, {transform_indices = @transform_7, window_bounds = array<i64: 8, 128>}, {transform_indices = @transform_8, window_bounds = array<i64: 8, 128>}]} {
    %c0 = arith.constant 0 : index
    %c0_0 = arith.constant 0 : index
    %0 = vector.load %arg1[%c0, %c0_0] : memref<8x16xf32, #tpu.memory_space<vmem>>, vector<8x16xf32>
    %1 = arith.truncf %0 : vector<8x16xf32> to vector<8x16xbf16>
    %c0_1 = arith.constant 0 : index
    %c0_2 = arith.constant 0 : index
    %2 = vector.load %arg2[%c0_1, %c0_2] : memref<16x32xf32, #tpu.memory_space<vmem>>, vector<16x32xf32>
    %3 = arith.truncf %2 : vector<16x32xf32> to vector<16x32xbf16>
    %cst = arith.constant dense<0.000000e+00> : vector<8x32xf32>
    %4 = tpu.matmul %1, %3, %cst {dimension_numbers = #tpu.dot_dimension_numbers<[1], [0], [0], [1], [0, 0, 1, 1], [], []>} : vector<8x16xbf16>, vector<16x32xbf16>, vector<8x32xf32> -> vector<8x32xf32>
    %c0_3 = arith.constant 0 : index
    %c0_4 = arith.constant 0 : index
    %5 = vector.load %arg3[%c0_3, %c0_4] : memref<1x32xf32, #tpu.memory_space<vmem>>, vector<1x32xf32>
    %6 = vector.broadcast %5 : vector<1x32xf32> to vector<8x32xf32>
    %7 = arith.addf %4, %6 : vector<8x32xf32>
    %cst_5 = arith.constant 0.000000e+00 : f32
    %8 = vector.broadcast %cst_5 : f32 to vector<8x32xf32>
    %9 = arith.maximumf %7, %8 : vector<8x32xf32>
    %c0_6 = arith.constant 0 : index
    %c0_7 = arith.constant 0 : index
    %10 = vector.load %arg4[%c0_6, %c0_7] : memref<32x128xf32, #tpu.memory_space<vmem>>, vector<32x128xf32>
    %11 = arith.truncf %10 : vector<32x128xf32> to vector<32x128xbf16>
    %12 = arith.truncf %9 : vector<8x32xf32> to vector<8x32xbf16>
    %cst_8 = arith.constant dense<0.000000e+00> : vector<8x128xf32>
    %13 = tpu.matmul %12, %11, %cst_8 {dimension_numbers = #tpu.dot_dimension_numbers<[1], [0], [0], [1], [0, 0, 1, 1], [], []>} : vector<8x32xbf16>, vector<32x128xbf16>, vector<8x128xf32> -> vector<8x128xf32>
    %c0_9 = arith.constant 0 : index
    %c0_10 = arith.constant 0 : index
    %14 = vector.load %arg5[%c0_9, %c0_10] : memref<1x128xf32, #tpu.memory_space<vmem>>, vector<1x128xf32>
    %15 = vector.broadcast %14 : vector<1x128xf32> to vector<8x128xf32>
    %16 = arith.addf %13, %15 : vector<8x128xf32>
    %c0_11 = arith.constant 0 : index
    %c0_12 = arith.constant 0 : index
    %17 = vector.load %arg7[%c0_11, %c0_12] : memref<8x128xf32, #tpu.memory_space<vmem>>, vector<8x128xf32>
    tpu.vector_store %arg7[%c0_11, %c0_12], %16 {strides = array<i32>} : memref<8x128xf32, #tpu.memory_space<vmem>>, vector<8x128xf32>,
    %cst_13 = arith.constant dense<0xFF800000> : vector<8xf32>
    %18 = vector.multi_reduction <maximumf>, %16, %cst_13 [1] : vector<8x128xf32> to vector<8xf32>
    %19 = vector.shape_cast %18 : vector<8xf32> to vector<8x1xf32>
    %20 = vector.broadcast %19 : vector<8x1xf32> to vector<8x128xf32>
    %21 = arith.subf %16, %20 : vector<8x128xf32>
    %22 = math.exp %21 : vector<8x128xf32>
    %cst_14 = arith.constant dense<0.000000e+00> : vector<8xf32>
    %23 = vector.multi_reduction <add>, %22, %cst_14 [1] : vector<8x128xf32> to vector<8xf32>
    %24 = vector.shape_cast %23 : vector<8xf32> to vector<8x1xf32>
    %25 = math.log %24 : vector<8x1xf32>
    %26 = vector.broadcast %25 : vector<8x1xf32> to vector<8x128xf32>
    %27 = arith.subf %21, %26 : vector<8x128xf32>
    %c0_15 = arith.constant 0 : index
    %c0_16 = arith.constant 0 : index
    %28 = vector.load %arg8[%c0_15, %c0_16] : memref<8x128xf32, #tpu.memory_space<vmem>>, vector<8x128xf32>
    tpu.vector_store %arg8[%c0_15, %c0_16], %27 {strides = array<i32>} : memref<8x128xf32, #tpu.memory_space<vmem>>, vector<8x128xf32>,
    %c0_17 = arith.constant 0 : index
    %c0_18 = arith.constant 0 : index
    %29 = vector.load %arg6[%c0_17, %c0_18] : memref<8x128xf32, #tpu.memory_space<vmem>>, vector<8x128xf32>
    %30 = arith.addf %16, %29 : vector<8x128xf32>
    %31 = tpu.iota {dimensions = array<i32: 1>} : vector<8x128xi32>
    %cst_19 = arith.constant dense<0xFF800000> : vector<8xf32>
    %32 = vector.multi_reduction <maximumf>, %30, %cst_19 [1] : vector<8x128xf32> to vector<8xf32>
    %33 = vector.shape_cast %32 : vector<8xf32> to vector<8x1xf32>
    %34 = vector.broadcast %33 : vector<8x1xf32> to vector<8x128xf32>
    %35 = arith.cmpf oeq, %30, %34 : vector<8x128xf32>
    %c128_i32 = arith.constant 128 : i32
    %36 = vector.broadcast %c128_i32 : i32 to vector<8x128xi32>
    %37 = arith.select %35, %31, %36 : vector<8x128xi1>, vector<8x128xi32>
    %cst_20 = arith.constant dense<2147483647> : vector<8xi32>
    %38 = vector.multi_reduction <minsi>, %37, %cst_20 [1] : vector<8x128xi32> to vector<8xi32>
    %39 = vector.shape_cast %38 : vector<8xi32> to vector<8x1xi32>
    %40 = vector.shape_cast %39 : vector<8x1xi32> to vector<8x1xi32>
    %41 = vector.broadcast %40 : vector<8x1xi32> to vector<8x128xi32>
    %c0_21 = arith.constant 0 : index
    %c0_22 = arith.constant 0 : index
    %42 = vector.load %arg9[%c0_21, %c0_22] : memref<8x128xi32, #tpu.memory_space<vmem>>, vector<8x128xi32>
    tpu.vector_store %arg9[%c0_21, %c0_22], %41 {strides = array<i32>} : memref<8x128xi32, #tpu.memory_space<vmem>>, vector<8x128xi32>,
    return
  }
  func.func @transform_0(%arg0: i32) -> (i32, i32) {
    %c0_i32 = arith.constant 0 : i32
    %c0_i32_0 = arith.constant 0 : i32
    return %arg0, %c0_i32 : i32, i32
  }
  func.func @transform_1(%arg0: i32) -> (i32, i32) {
    %c0_i32 = arith.constant 0 : i32
    %c0_i32_0 = arith.constant 0 : i32
    %c0_i32_1 = arith.constant 0 : i32
    return %c0_i32, %c0_i32_0 : i32, i32
  }
  func.func @transform_2(%arg0: i32) -> (i32, i32) {
    %c0_i32 = arith.constant 0 : i32
    %c0_i32_0 = arith.constant 0 : i32
    %c0_i32_1 = arith.constant 0 : i32
    return %c0_i32, %c0_i32_0 : i32, i32
  }
  func.func @transform_3(%arg0: i32) -> (i32, i32) {
    %c0_i32 = arith.constant 0 : i32
    %c0_i32_0 = arith.constant 0 : i32
    %c0_i32_1 = arith.constant 0 : i32
    return %c0_i32, %c0_i32_0 : i32, i32
  }
  func.func @transform_4(%arg0: i32) -> (i32, i32) {
    %c0_i32 = arith.constant 0 : i32
    %c0_i32_0 = arith.constant 0 : i32
    %c0_i32_1 = arith.constant 0 : i32
    return %c0_i32, %c0_i32_0 : i32, i32
  }
  func.func @transform_5(%arg0: i32) -> (i32, i32) {
    %c0_i32 = arith.constant 0 : i32
    %c0_i32_0 = arith.constant 0 : i32
    return %arg0, %c0_i32 : i32, i32
  }
  func.func @transform_6(%arg0: i32) -> (i32, i32) {
    %c0_i32 = arith.constant 0 : i32
    %c0_i32_0 = arith.constant 0 : i32
    return %arg0, %c0_i32 : i32, i32
  }
  func.func @transform_7(%arg0: i32) -> (i32, i32) {
    %c0_i32 = arith.constant 0 : i32
    %c0_i32_0 = arith.constant 0 : i32
    return %arg0, %c0_i32 : i32, i32
  }
  func.func @transform_8(%arg0: i32) -> (i32, i32) {
    %c0_i32 = arith.constant 0 : i32
    %c0_i32_0 = arith.constant 0 : i32
    return %arg0, %c0_i32 : i32, i32
  }
}

</mosaic_0001>

<llo_original>
// kernel: tpu_custom_call.1
$region0: #{tpu_custom_call.1}
  #allocation0 [shape = 'u32[]', space=smem, size = 0x4, offset = 0x4, fixed_abs, tag = 'smem constant byte address 0x4 - core index']
  #allocation1 [shape = 'u32[144,128]{1,0:T(1,128)}', space=vmem, size = 0x12000, scoped, tag = 'internal scratch']
  %s0 = inlined_call_operand.hbm [shape: f32[8,16], index: 0, kind: input, shape index: {}]
  %s1 = inlined_call_operand.hbm [shape: f32[16,32], index: 1, kind: input, shape index: {}]
  %s2 = inlined_call_operand.vmem [shape: f32[1,32], index: 2, kind: input, shape index: {}]
  %s3 = inlined_call_operand.hbm [shape: f32[32,128], index: 3, kind: input, shape index: {}]
  %s4 = inlined_call_operand.vmem [shape: f32[1,128], index: 4, kind: input, shape index: {}]
  %s5 = inlined_call_operand.vmem [shape: f32[8,128], index: 5, kind: input, shape index: {}]
  %s6 = inlined_call_operand.hbm [shape: f32[8,128], index: 6, kind: output, shape index: {0}]
  %s7 = inlined_call_operand.hbm [shape: f32[8,128], index: 7, kind: output, shape index: {1}]
  %s8 = inlined_call_operand.hbm [shape: s32[8,128], index: 8, kind: output, shape index: {2}]
  %9 = xla_tuple %s6, %s7, %s8
  %s10 = sld [smem:[#allocation0]]
  $region62: #{tpu_custom_call.1} parent=0
    _
  %s12 = ssub.s32 1, %s10
  %s13 = scalar_select 0, %s12, %s10
  $region1: #{tpu_custom_call.1} parent=0
    #allocation2 [shape = 'u8[4096]{0}', space=vmem, size = 0x1000, scoped, tag = 'input window, operand 0, single buffered']
    #allocation3 [shape = 's32[1]{0}', space=sflag, size = 0x4, scoped, tag = 'scoped memory for tpu_custom_call.1']
    #allocation4 [shape = 's32[1]{0}', space=sflag, size = 0x4, scoped, tag = 'scoped memory for tpu_custom_call.1']
    #allocation5 [shape = 'u8[8192]{0}', space=vmem, size = 0x2000, scoped, tag = 'input window, operand 1, single buffered']
    #allocation6 [shape = 's32[1]{0}', space=sflag, size = 0x4, scoped, tag = 'scoped memory for tpu_custom_call.1']
    #allocation7 [shape = 'u8[16384]{0}', space=vmem, size = 0x4000, scoped, tag = 'input window, operand 3, single buffered']
    #allocation8 [shape = 'u8[4096]{0}', space=vmem, size = 0x1000, scoped, tag = 'output window, operand 0, single buffered']
    #allocation9 [shape = 'u8[4096]{0}', space=vmem, size = 0x1000, scoped, tag = 'output window, operand 1, single buffered']
    #allocation10 [shape = 's32[1]{0}', space=sflag, size = 0x4, scoped, tag = 'scoped memory for tpu_custom_call.1']
    #allocation11 [shape = 'u8[4096]{0}', space=vmem, size = 0x1000, scoped, tag = 'output window, operand 2, single buffered']
    %14 = vsyncpa [#allocation3], 0
    %15 = vsyncpa [#allocation6], 0
    %16 = vsyncpa [#allocation4], 0
    %17 = vsyncpa [#allocation10], 0
    // Predicated region
    $region2: #{tpu_custom_call.1} parent=1 // pred_check
      _
    $region3: #{tpu_custom_call.1} parent=1 // pred_check_branch
      %19 = sbr.rel (0) target = $region5
    $region4: #{tpu_custom_call.1} parent=1 // pred_region
      %s21 = ssub.s32 128, 128
      %22 = vsyncadd [#allocation3], %s21
      %s24 = sshll.u32 [#allocation2], 4
      %s25 = int_to_ptr.vmem [resolvable:$true] %s24
      %27 = dma.hbm_to_vmem [thread:$0]  %s0, 128, %s25, [#allocation3]
    $region5: #{tpu_custom_call.1} parent=1 // pred_fallthru
      _
    // Predicated region
    $region6: #{tpu_custom_call.1} parent=1 // pred_check
      _
    $region7: #{tpu_custom_call.1} parent=1 // pred_check_branch
      %29 = sbr.rel (0) target = $region9
    $region8: #{tpu_custom_call.1} parent=1 // pred_region
      %s31 = ssub.s32 256, 256
      %32 = vsyncadd [#allocation6], %s31
      %s33 = sshll.u32 [#allocation5], 4
      %s34 = int_to_ptr.vmem [resolvable:$true] %s33
      %39 = dma.hbm_to_vmem [thread:$0]  %s1, 256, %s34, [#allocation6], 128, 128, 8
    $region9: #{tpu_custom_call.1} parent=1 // pred_fallthru
      _
    // Predicated region
    $region10: #{tpu_custom_call.1} parent=1 // pred_check
      _
    $region11: #{tpu_custom_call.1} parent=1 // pred_check_branch
      %41 = sbr.rel (0) target = $region13
    $region12: #{tpu_custom_call.1} parent=1 // pred_region
      _
    $region13: #{tpu_custom_call.1} parent=1 // pred_fallthru
      _
    // Predicated region
    $region14: #{tpu_custom_call.1} parent=1 // pred_check
      _
    $region15: #{tpu_custom_call.1} parent=1 // pred_check_branch
      %43 = sbr.rel (0) target = $region17
    $region16: #{tpu_custom_call.1} parent=1 // pred_region
      %s45 = ssub.s32 512, 512
      %46 = vsyncadd [#allocation6], %s45
      %s47 = sshll.u32 [#allocation7], 4
      %s48 = int_to_ptr.vmem [resolvable:$true] %s47
      %53 = dma.hbm_to_vmem [thread:$0]  %s3, 512, %s48, [#allocation6], 128, 128, 8
    $region17: #{tpu_custom_call.1} parent=1 // pred_fallthru
      _
    // Predicated region
    $region18: #{tpu_custom_call.1} parent=1 // pred_check
      _
    $region19: #{tpu_custom_call.1} parent=1 // pred_check_branch
      %55 = sbr.rel (0) target = $region21
    $region20: #{tpu_custom_call.1} parent=1 // pred_region
      _
    $region21: #{tpu_custom_call.1} parent=1 // pred_fallthru
      _
    // Predicated region
    $region22: #{tpu_custom_call.1} parent=1 // pred_check
      _
    $region23: #{tpu_custom_call.1} parent=1 // pred_check_branch
      %57 = sbr.rel (0) target = $region25
    $region24: #{tpu_custom_call.1} parent=1 // pred_region
      _
    $region25: #{tpu_custom_call.1} parent=1 // pred_fallthru
      _
    // Predicated region
    $region26: #{tpu_custom_call.1} parent=1 // pred_check
      _
    $region27: #{tpu_custom_call.1} parent=1 // pred_check_branch
      %59 = sbr.rel (0) target = $region29
    $region28: #{tpu_custom_call.1} parent=1 // pred_region
      %60 = dma.done [#allocation3], 128
    $region29: #{tpu_custom_call.1} parent=1 // pred_fallthru
      _
    // Predicated region
    $region30: #{tpu_custom_call.1} parent=1 // pred_check
      _
    $region31: #{tpu_custom_call.1} parent=1 // pred_check_branch
      %62 = sbr.rel (0) target = $region33
    $region32: #{tpu_custom_call.1} parent=1 // pred_region
      %63 = dma.done [#allocation6], 256
    $region33: #{tpu_custom_call.1} parent=1 // pred_fallthru
      _
    // Predicated region
    $region34: #{tpu_custom_call.1} parent=1 // pred_check
      _
    $region35: #{tpu_custom_call.1} parent=1 // pred_check_branch
      %65 = sbr.rel (0) target = $region37
    $region36: #{tpu_custom_call.1} parent=1 // pred_region
      %66 = dma.done [#allocation6], 512
    $region37: #{tpu_custom_call.1} parent=1 // pred_fallthru
      _
    %v68 = vld [vmem:[#allocation2] sm:$0xff]
    %v69 = vpack.c.bf16 %v68, %v68
    %v70 = vld [vmem:[#allocation5] sm:$0xff]
    %v71 = vld [vmem:[#allocation5 + $0x8] sm:$0xff]
    %v72 = vpack.c.bf16 %v71, %v70
    %v73 = vld [vmem:[%s2] sm:$0x1]
    %v75 = vlaneseq
    %v76 = vshrl.u32 %v75, 7
    %v77 = vsub.s32 0, %v76
    %v78 = vrot.slane %v73, %v77
    %vm80 = vcmask 130048
    %v82 = vsel %vm80, %v69, 0
    %84 = vmatprep.subr.bf16.mxu0 0
    %85 = vmatpush1.bf16.msra.mxu0 %v72
    %86 = vmatprep.subr.bf16.mxu0 0
    %87 = vmatpush1.bf16.msra.mxu0 0
    %88 = vmatprep.subr.bf16.mxu0 0
    %89 = vmatpush1.bf16.msra.mxu0 0
    %90 = vmatprep.subr.bf16.mxu0 0
    %91 = vmatpush1.bf16.msra.mxu0 0
    %92 = vmatprep.subr.bf16.mxu0 0
    %93 = vmatpush1.bf16.msra.mxu0 0
    %94 = vmatprep.subr.bf16.mxu0 0
    %95 = vmatpush1.bf16.msra.mxu0 0
    %96 = vmatprep.subr.bf16.mxu0 0
    %97 = vmatpush1.bf16.msra.mxu0 0
    %98 = vmatprep.subr.bf16.mxu0 0
    %99 = vmatpush1.bf16.msra.mxu0 0
    %100 = vmatprep.subr.bf16.mxu0 0
    %101 = vmatpush1.bf16.msra.mxu0 0
    %102 = vmatprep.subr.bf16.mxu0 0
    %103 = vmatpush1.bf16.msra.mxu0 0
    %104 = vmatprep.subr.bf16.mxu0 0
    %105 = vmatpush1.bf16.msra.mxu0 0
    %106 = vmatprep.subr.bf16.mxu0 0
    %107 = vmatpush1.bf16.msra.mxu0 0
    %108 = vmatprep.subr.bf16.mxu0 0
    %109 = vmatpush1.bf16.msra.mxu0 0
    %110 = vmatprep.subr.bf16.mxu0 0
    %111 = vmatpush1.bf16.msra.mxu0 0
    %112 = vmatprep.subr.bf16.mxu0 0
    %113 = vmatpush1.bf16.msra.mxu0 0
    %114 = vmatprep.subr.bf16.mxu0 0
    %115 = vmatpush1.bf16.msra.mxu0 0
    %116 = vmatprep.mubr.bf16.mxu0 0
    %117 = vmatmul.mubr.bf16.gmra.mrb[0].mxu0 %v82
    %v118 = vpop.f32.mrb[0].mxu0
    %v119 = vadd.f32 %v78, %v118
    %v120 = vpop.f32.mrb[0].mxu0
    %v121 = vpop.f32.mrb[0].mxu0
    %v122 = vpop.f32.mrb[0].mxu0
    %123 = vdwg.mxu0
    %v124 = vmax.f32 %v119, 0.0
    %v125 = vld [vmem:[#allocation7] sm:$0xff]
    %v126 = vld [vmem:[#allocation7 + $0x8] sm:$0xff]
    %v127 = vld [vmem:[#allocation7 + $0x10] sm:$0xff]
    %v128 = vld [vmem:[#allocation7 + $0x18] sm:$0xff]
    %v129 = vpack.c.bf16 %v126, %v125
    %v130 = vpack.c.bf16 %v128, %v127
    %v131 = vpack.c.bf16 %v124, %v124
    %v132 = vld [vmem:[%s4] sm:$0x1]
    %v134 = vlaneseq
    %v135 = vshrl.u32 %v134, 7
    %v136 = vsub.s32 0, %v135
    %v137 = vrot.slane %v132, %v136
    %vm139 = vcmask 261120
    %v141 = vsel %vm139, %v131, 0
    %143 = vmatprep.subr.bf16.mxu0 0
    %144 = vmatpush1.bf16.msra.mxu0 %v129
    %145 = vmatprep.subr.bf16.mxu0 0
    %146 = vmatpush1.bf16.msra.mxu0 %v130
    %147 = vmatprep.subr.bf16.mxu0 0
    %148 = vmatpush1.bf16.msra.mxu0 0
    %149 = vmatprep.subr.bf16.mxu0 0
    %150 = vmatpush1.bf16.msra.mxu0 0
    %151 = vmatprep.subr.bf16.mxu0 0
    %152 = vmatpush1.bf16.msra.mxu0 0
    %153 = vmatprep.subr.bf16.mxu0 0
    %154 = vmatpush1.bf16.msra.mxu0 0
    %155 = vmatprep.subr.bf16.mxu0 0
    %156 = vmatpush1.bf16.msra.mxu0 0
    %157 = vmatprep.subr.bf16.mxu0 0
    %158 = vmatpush1.bf16.msra.mxu0 0
    %159 = vmatprep.subr.bf16.mxu0 0
    %160 = vmatpush1.bf16.msra.mxu0 0
    %161 = vmatprep.subr.bf16.mxu0 0
    %162 = vmatpush1.bf16.msra.mxu0 0
    %163 = vmatprep.subr.bf16.mxu0 0
    %164 = vmatpush1.bf16.msra.mxu0 0
    %165 = vmatprep.subr.bf16.mxu0 0
    %166 = vmatpush1.bf16.msra.mxu0 0
    %167 = vmatprep.subr.bf16.mxu0 0
    %168 = vmatpush1.bf16.msra.mxu0 0
    %169 = vmatprep.subr.bf16.mxu0 0
    %170 = vmatpush1.bf16.msra.mxu0 0
    %171 = vmatprep.subr.bf16.mxu0 0
    %172 = vmatpush1.bf16.msra.mxu0 0
    %173 = vmatprep.subr.bf16.mxu0 0
    %174 = vmatpush1.bf16.msra.mxu0 0
    %175 = vmatprep.mubr.bf16.mxu0 0
    %176 = vmatmul.mubr.bf16.gmra.mrb[0].mxu0 %v141
    %v177 = vpop.f32.mrb[0].mxu0
    %v178 = vadd.f32 %v137, %v177
    %v179 = vpop.f32.mrb[0].mxu0
    %v180 = vpop.f32.mrb[0].mxu0
    %v181 = vpop.f32.mrb[0].mxu0
    %182 = vdwg.mxu0
    %183 = vst [vmem:[#allocation8] sm:$0xff] %v178
    %184 = vmax.xlane.f32.xlu0 %v178
    %v185 = vpop.xlane.xlu0 %184
    %v186 = vsub.f32 %v178, %v185
    %v187 = vmul.f32 %v186, 1.442695
    %v188 = vpow.pop %v187
    %189 = vadd.xlane.f32.xlu0 %v188
    %v190 = vpop.xlane.xlu0 %189
    %v191 = vlog2.pop %v190
    %v192 = vmul.f32 %v191, 0.6931472
    %v193 = vsub.f32 %v186, %v192
    %194 = vst [vmem:[#allocation9] sm:$0xff] %v193
    %v195 = vld [vmem:[%s5] sm:$0xff]
    %v196 = vadd.f32 %v178, %v195
    %v197 = vlaneseq
    %v198 = vand.u32 %v197, 127
    %199 = vmax.xlane.f32.xlu0 %v196
    %v200 = vpop.xlane.xlu0 %199
    %vm201 = vcmp.eq.f32.partialorder %v196, %v200
    %v202 = vsel %vm201, %v198, 128
    %v203 = vand.u32 %v202, 65535
    %v204 = vshra.s32 %v202, 16
    %v205 = vcvt.s32.f32 %v203
    %v206 = vcvt.s32.f32 %v204
    %207 = vmin.xlane.f32.xlu0 %v206
    %v208 = vpop.xlane.xlu0 %207
    %vm209 = vcmp.eq.f32.partialorder %v206, %v208
    %v210 = vsel %vm209, %v205, inf
    %211 = vmin.xlane.f32.xlu0 %v210
    %v212 = vpop.xlane.xlu0 %211
    %v213 = vcvt.f32.s32 %v212
    %v214 = vcvt.f32.s32 %v208
    %v215 = vshll.u32 %v214, 16
    %v216 = vadd.s32 %v215, %v213
    %217 = vst [vmem:[#allocation11] sm:$0xff] %v216
    // Predicated region
    $region38: #{tpu_custom_call.1} parent=1 // pred_check
      _
    $region39: #{tpu_custom_call.1} parent=1 // pred_check_branch
      %219 = sbr.rel (0) target = $region41
    $region40: #{tpu_custom_call.1} parent=1 // pred_region
      %s221 = ssub.s32 128, 128
      %222 = vsyncadd [#allocation4], %s221
      %s224 = sshll.u32 [#allocation8], 4
      %s225 = int_to_ptr.vmem [resolvable:$true] %s224
      %227 = dma.vmem_to_hbm [thread:$0]  %s225, 128, %s6, [#allocation4]
    $region41: #{tpu_custom_call.1} parent=1 // pred_fallthru
      _
    // Predicated region
    $region42: #{tpu_custom_call.1} parent=1 // pred_check
      _
    $region43: #{tpu_custom_call.1} parent=1 // pred_check_branch
      %229 = sbr.rel (0) target = $region45
    $region44: #{tpu_custom_call.1} parent=1 // pred_region
      %s231 = ssub.s32 128, 128
      %232 = vsyncadd [#allocation10], %s231
      %s234 = sshll.u32 [#allocation9], 4
      %s235 = int_to_ptr.vmem [resolvable:$true] %s234
      %237 = dma.vmem_to_hbm [thread:$0]  %s235, 128, %s7, [#allocation10]
    $region45: #{tpu_custom_call.1} parent=1 // pred_fallthru
      _
    // Predicated region
    $region46: #{tpu_custom_call.1} parent=1 // pred_check
      _
    $region47: #{tpu_custom_call.1} parent=1 // pred_check_branch
      %239 = sbr.rel (0) target = $region49
    $region48: #{tpu_custom_call.1} parent=1 // pred_region
      %s241 = ssub.s32 128, 128
      %242 = vsyncadd [#allocation10], %s241
      %s244 = sshll.u32 [#allocation11], 4
      %s245 = int_to_ptr.vmem [resolvable:$true] %s244
      %247 = dma.vmem_to_hbm [thread:$0]  %s245, 128, %s8, [#allocation10]
    $region49: #{tpu_custom_call.1} parent=1 // pred_fallthru
      _
    // Predicated region
    $region50: #{tpu_custom_call.1} parent=1 // pred_check
      _
    $region51: #{tpu_custom_call.1} parent=1 // pred_check_branch
      %249 = sbr.rel (0) target = $region53
    $region52: #{tpu_custom_call.1} parent=1 // pred_region
      %250 = dma.done [#allocation4], 128
    $region53: #{tpu_custom_call.1} parent=1 // pred_fallthru
      _
    // Predicated region
    $region54: #{tpu_custom_call.1} parent=1 // pred_check
      _
    $region55: #{tpu_custom_call.1} parent=1 // pred_check_branch
      %252 = sbr.rel (0) target = $region57
    $region56: #{tpu_custom_call.1} parent=1 // pred_region
      %253 = dma.done [#allocation10], 128
    $region57: #{tpu_custom_call.1} parent=1 // pred_fallthru
      _
    // Predicated region
    $region58: #{tpu_custom_call.1} parent=1 // pred_check
      _
    $region59: #{tpu_custom_call.1} parent=1 // pred_check_branch
      %255 = sbr.rel (0) target = $region61
    $region60: #{tpu_custom_call.1} parent=1 // pred_region
      %256 = dma.done [#allocation10], 128
    $region61: #{tpu_custom_call.1} parent=1 // pred_fallthru
      _
    %257 = vsyncpa [#allocation3], 1
    %258 = vsyncpa [#allocation6], 1
    %259 = vsyncpa [#allocation4], 1
    %260 = vsyncpa [#allocation10], 1

</llo_original>
